<compile_context>
chip_gen: v7x
topology: tpu7x:2x2x1
jax: 0.10.0
libtpu: 0.0.40
codegen_flags: <defaults>
</compile_context>

<pallas_src>
import functools

import jax
import jax.numpy as jnp
from jax import lax
from jax.experimental import pallas as pl
from jax.experimental.pallas import tpu as pltpu


_VMEM_LIMIT_BYTES = 48 * 1024 * 1024       # safe on v5e/v6e (128 MiB) and v7x (64 MiB)
_VMEM_TILE_BUDGET = 32 * 1024 * 1024       # target working set incl. double buffers
_RESIDENT_WEIGHT_BUDGET = 16 * 1024 * 1024  # weight+bias (x2 buffers) must fit this


def _round_up(x, m):
    return ((x + m - 1) // m) * m


# --------------------------------------------------------------------------- #
# Kernels
# --------------------------------------------------------------------------- #
def _linear_resident_kernel(x_ref, w_ref, b_ref, o_ref):
    """One (tm, N) output stripe; the full (K, N) weight and (1, N) bias are
    VMEM-resident across the whole grid (constant index_map -> DMA'd once)."""
    o_ref[...] = (
        jnp.dot(x_ref[...], w_ref[...], preferred_element_type=jnp.float32)
        + b_ref[...]
    ).astype(o_ref.dtype)


def _linear_tiled_kernel(x_ref, w_ref, b_ref, o_ref, *, k_total, tk):
    """One (tm, tn) output tile, accumulating over the K grid axis directly into
    the f32 output block (VMEM-resident across k; no acc scratch)."""
    k = pl.program_id(2)

    @pl.when(k == 0)
    def _():
        o_ref[...] = jnp.zeros_like(o_ref)

    x = x_ref[...]
    w = w_ref[...]
    if k_total % tk:
        # K does not divide the tile: zero the tail of the last K block in-kernel
        # (cheaper than padding the activations in HBM).  Both operands are
        # zeroed so out-of-bounds garbage never reaches valid outputs.
        valid = k_total - k * tk
        x = jnp.where(lax.broadcasted_iota(jnp.int32, x.shape, 1) < valid, x, 0.0)
        w = jnp.where(lax.broadcasted_iota(jnp.int32, w.shape, 0) < valid, w, 0.0)

    o_ref[...] += jnp.dot(x, w, preferred_element_type=jnp.float32)

    @pl.when(k == pl.num_programs(2) - 1)
    def _():
        o_ref[...] += b_ref[...]


# --------------------------------------------------------------------------- #
# Wrappers
# --------------------------------------------------------------------------- #
def prepare_linear_params(weight, bias):
    """One-time parameter prep -- call OUTSIDE the per-step hot path.

    weight: (act_size, obs_size) in PyTorch layout.
    Returns (w_t, b_row): weight as (obs_size, act_size) so the kernel's matmul
    contracts lhs[1] with rhs[0] on the MXU (no per-tile transpose), and bias
    as a (1, act_size) row.
    """
    w_t = jnp.asarray(weight).T
    b_row = jnp.asarray(bias).reshape(1, -1)
    return w_t, b_row


def _forward_resident(obs, w_t, b_row, B, K, N, resident_bytes):
    # Largest M stripe that (a) fits the VMEM budget together with the resident
    # weight and (b) leaves >= 2 grid blocks so "parallel" can shard across the
    # two v7x TensorCores when the batch allows it.
    cap = 512
    while True:
        tm = min(_round_up(B, 8), cap)
        footprint = resident_bytes + 2 * 4 * tm * (K + N)  # x + out, 2 buffers each
        if footprint <= _VMEM_TILE_BUDGET or cap == 8:
            break
        cap //= 2
    if B >= 64:
        tm = min(tm, _round_up((B + 1) // 2, 8))

    return pl.pallas_call(
        _linear_resident_kernel,
        out_shape=jax.ShapeDtypeStruct((B, N), obs.dtype),
        grid=(pl.cdiv(B, tm),),
        in_specs=[
            pl.BlockSpec((tm, K), lambda i: (i, 0)),   # activation stripe
            pl.BlockSpec((K, N), lambda i: (0, 0)),    # weight: resident
            pl.BlockSpec((1, N), lambda i: (0, 0)),    # bias: resident
        ],
        out_specs=pl.BlockSpec((tm, N), lambda i: (i, 0)),
        compiler_params=pltpu.CompilerParams(
            dimension_semantics=("parallel",),
            vmem_limit_bytes=_VMEM_LIMIT_BYTES,
        ),
    )(obs, w_t, b_row)


def _forward_tiled(obs, w_t, b_row, B, K, N):
    # Large-weight fallback: lane-dense tiles near the measured roofline sweet
    # spot (>= 512 wide), footprint ~10 MiB incl. double buffers (v7x safe).
    assert obs.dtype == jnp.float32, "tiled path accumulates into the f32 output"
    tm = min(_round_up(B, 8), 512)
    tn = min(_round_up(N, 128), 512)
    tk = min(_round_up(K, 128), 1024)

    kernel = functools.partial(_linear_tiled_kernel, k_total=K, tk=tk)
    return pl.pallas_call(
        kernel,
        out_shape=jax.ShapeDtypeStruct((B, N), obs.dtype),
        grid=(pl.cdiv(B, tm), pl.cdiv(N, tn), pl.cdiv(K, tk)),
        in_specs=[
            pl.BlockSpec((tm, tk), lambda i, j, k: (i, k)),  # activations
            pl.BlockSpec((tk, tn), lambda i, j, k: (k, j)),  # weight in (K, N)
            pl.BlockSpec((1, tn), lambda i, j, k: (0, j)),   # bias row
        ],
        out_specs=pl.BlockSpec((tm, tn), lambda i, j, k: (i, j)),
        compiler_params=pltpu.CompilerParams(
            dimension_semantics=("parallel", "parallel", "arbitrary"),
            vmem_limit_bytes=_VMEM_LIMIT_BYTES,
        ),
    )(obs, w_t, b_row)


@jax.jit
def nn_linear_forward(obs, w_t, b_row):
    """Forward of nn.Linear with prepared params: out = obs @ w_t + b_row.

    obs:   (B, obs_size)           f32
    w_t:   (obs_size, act_size)    f32   (pre-transposed once by prepare_linear_params)
    b_row: (1, act_size)           f32
    """
    B, K = obs.shape
    K2, N = w_t.shape
    assert K == K2, "weight/obs feature-dim mismatch"
    assert b_row.shape == (1, N)

    resident_bytes = 2 * 4 * (K * N + N)   # weight + bias, double-buffered, f32
    if resident_bytes <= _RESIDENT_WEIGHT_BUDGET:
        return _forward_resident(obs, w_t, b_row, B, K, N, resident_bytes)
    return _forward_tiled(obs, w_t, b_row, B, K, N)


# --------------------------------------------------------------------------- #
# Self-test
# --------------------------------------------------------------------------- #
if __name__ == "__main__":
    def make_case(k, B, obs_size, act_size):
        k_obs, k_w, k_b = jax.random.split(k, 3)
        bound = 1.0 / jnp.sqrt(jnp.float32(obs_size))
        weight = jax.random.uniform(k_w, (act_size, obs_size), jnp.float32,
                                    minval=-bound, maxval=bound)
        bias = jax.random.uniform(k_b, (act_size,), jnp.float32,
                                  minval=-bound, maxval=bound)
        obs = jax.random.normal(k_obs, (B, obs_size), jnp.float32)
        return obs, weight, bias

    # Case 1: DQN-like small shape (batch=8, obs_size=32, act_size=8).
    obs, weight, bias = make_case(jax.random.PRNGKey(0), 8, 32, 8)
    w_t, b_row = prepare_linear_params(weight, bias)          # one-time prep
    out = nn_linear_forward(obs, w_t, b_row)
    jax.block_until_ready(out)
    ref = obs @ weight.T + bias
    assert out.shape == ref.shape
    assert jnp.allclose(out, ref, atol=1e-4, rtol=1e-4)

    # Case 2: non-aligned shapes, still the resident-weight fast path
    # (edge M block handled by Pallas masking -- no host pad / output slice).
    obs2, weight2, bias2 = make_case(jax.random.PRNGKey(1), 513, 300, 130)
    w_t2, b_row2 = prepare_linear_params(weight2, bias2)
    out2 = nn_linear_forward(obs2, w_t2, b_row2)
    jax.block_until_ready(out2)
    ref2 = obs2 @ weight2.T + bias2
    assert out2.shape == ref2.shape
    assert jnp.allclose(out2, ref2, atol=1e-4, rtol=1e-4)

    # Case 3: weight too large for the resident path -> exercises the tiled
    # (M, N, K) grid with in-kernel K-tail masking and edge blocks on M.
    obs3, weight3, bias3 = make_case(jax.random.PRNGKey(2), 600, 2176, 1024)
    w_t3, b_row3 = prepare_linear_params(weight3, bias3)
    out3 = nn_linear_forward(obs3, w_t3, b_row3)
    jax.block_until_ready(out3)
    ref3 = obs3 @ weight3.T + bias3
    assert out3.shape == ref3.shape
    rel_err = jnp.linalg.norm(out3 - ref3) / jnp.linalg.norm(ref3)
    assert rel_err < 2e-2, rel_err

    print("KERNEL_OK")
</pallas_src>

<mosaic_0001>
module attributes {stable_mosaic.version = 11 : i64} {
  func.func @_linear_resident_kernel(%arg0: i32, %arg1: memref<8x32xf32, #tpu.memory_space<vmem>>, %arg2: memref<32x8xf32, #tpu.memory_space<vmem>>, %arg3: memref<1x8xf32, #tpu.memory_space<vmem>>, %arg4: memref<8x8xf32, #tpu.memory_space<vmem>>) attributes {dimension_semantics = [#tpu.dimension_semantics<parallel>], iteration_bounds = array<i64: 1>, scalar_prefetch = 0 : i64, scratch_operands = 0 : i64, tpu.core_type = #tpu.core_type<tc>, window_params = [{transform_indices = @transform_0, window_bounds = array<i64: 8, 32>}, {pipeline_mode = #tpu.pipeline_mode<synchronous>, transform_indices = @transform_1, window_bounds = array<i64: 32, 8>}, {pipeline_mode = #tpu.pipeline_mode<synchronous>, transform_indices = @transform_2, window_bounds = array<i64: 1, 8>}, {transform_indices = @transform_3, window_bounds = array<i64: 8, 8>}]} {
    %c0 = arith.constant 0 : index
    %c0_0 = arith.constant 0 : index
    %0 = vector.load %arg1[%c0, %c0_0] : memref<8x32xf32, #tpu.memory_space<vmem>>, vector<8x32xf32>
    %c0_1 = arith.constant 0 : index
    %c0_2 = arith.constant 0 : index
    %1 = vector.load %arg2[%c0_1, %c0_2] : memref<32x8xf32, #tpu.memory_space<vmem>>, vector<32x8xf32>
    %cst = arith.constant dense<0.000000e+00> : vector<8x8xf32>
    %2 = tpu.matmul %0, %1, %cst {dimension_numbers = #tpu.dot_dimension_numbers<[1], [0], [0], [1], [0, 0, 1, 1], [], []>} : vector<8x32xf32>, vector<32x8xf32>, vector<8x8xf32> -> vector<8x8xf32>
    %c0_3 = arith.constant 0 : index
    %c0_4 = arith.constant 0 : index
    %3 = vector.load %arg3[%c0_3, %c0_4] : memref<1x8xf32, #tpu.memory_space<vmem>>, vector<1x8xf32>
    %4 = vector.broadcast %3 : vector<1x8xf32> to vector<8x8xf32>
    %5 = arith.addf %2, %4 : vector<8x8xf32>
    %c0_5 = arith.constant 0 : index
    %c0_6 = arith.constant 0 : index
    %6 = vector.load %arg4[%c0_5, %c0_6] : memref<8x8xf32, #tpu.memory_space<vmem>>, vector<8x8xf32>
    tpu.vector_store %arg4[%c0_5, %c0_6], %5 {strides = array<i32>} : memref<8x8xf32, #tpu.memory_space<vmem>>, vector<8x8xf32>,
    return
  }
  func.func @transform_0(%arg0: i32) -> (i32, i32) {
    %c0_i32 = arith.constant 0 : i32
    %c0_i32_0 = arith.constant 0 : i32
    return %arg0, %c0_i32 : i32, i32
  }
  func.func @transform_1(%arg0: i32) -> (i32, i32) {
    %c0_i32 = arith.constant 0 : i32
    %c0_i32_0 = arith.constant 0 : i32
    %c0_i32_1 = arith.constant 0 : i32
    return %c0_i32, %c0_i32_0 : i32, i32
  }
  func.func @transform_2(%arg0: i32) -> (i32, i32) {
    %c0_i32 = arith.constant 0 : i32
    %c0_i32_0 = arith.constant 0 : i32
    %c0_i32_1 = arith.constant 0 : i32
    return %c0_i32, %c0_i32_0 : i32, i32
  }
  func.func @transform_3(%arg0: i32) -> (i32, i32) {
    %c0_i32 = arith.constant 0 : i32
    %c0_i32_0 = arith.constant 0 : i32
    return %arg0, %c0_i32 : i32, i32
  }
}

</mosaic_0001>

<llo_original>
// kernel: nn_linear_forward.1
$region0: #{nn_linear_forward.1}
  #allocation0 [shape = 'u32[]', space=smem, size = 0x4, offset = 0x4, fixed_abs, tag = 'smem constant byte address 0x4 - core index']
  #allocation1 [shape = 'u32[144,128]{1,0:T(1,128)}', space=vmem, size = 0x12000, scoped, tag = 'internal scratch']
  %s0 = inlined_call_operand.vmem [shape: f32[8,32], index: 0, kind: input, shape index: {}]
  %s1 = inlined_call_operand.vmem [shape: f32[32,8], index: 1, kind: input, shape index: {}]
  %s2 = inlined_call_operand.vmem [shape: f32[1,8], index: 2, kind: input, shape index: {}]
  %s3 = inlined_call_operand.hbm [shape: f32[8,8], index: 3, kind: output, shape index: {}]
  %s4 = sld [smem:[#allocation0]]
  $region22: #{nn_linear_forward.1} parent=0
    _
  %s6 = ssub.s32 1, %s4
  %s7 = scalar_select 0, %s6, %s4
  $region1: #{nn_linear_forward.1} parent=0
    #allocation2 [shape = 'u8[4096]{0}', space=vmem, size = 0x1000, scoped, tag = 'output window, operand 0, single buffered']
    #allocation3 [shape = 's32[1]{0}', space=sflag, size = 0x4, scoped, tag = 'scoped memory for nn_linear_forward.1']
    %8 = vsyncpa [#allocation3], 0
    // Predicated region
    $region2: #{nn_linear_forward.1} parent=1 // pred_check
      _
    $region3: #{nn_linear_forward.1} parent=1 // pred_check_branch
      %10 = sbr.rel (0) target = $region5
    $region4: #{nn_linear_forward.1} parent=1 // pred_region
      _
    $region5: #{nn_linear_forward.1} parent=1 // pred_fallthru
      _
    // Predicated region
    $region6: #{nn_linear_forward.1} parent=1 // pred_check
      _
    $region7: #{nn_linear_forward.1} parent=1 // pred_check_branch
      %12 = sbr.rel (0) target = $region9
    $region8: #{nn_linear_forward.1} parent=1 // pred_region
      _
    $region9: #{nn_linear_forward.1} parent=1 // pred_fallthru
      _
    // Predicated region
    $region10: #{nn_linear_forward.1} parent=1 // pred_check
      _
    $region11: #{nn_linear_forward.1} parent=1 // pred_check_branch
      %14 = sbr.rel (0) target = $region13
    $region12: #{nn_linear_forward.1} parent=1 // pred_region
      _
    $region13: #{nn_linear_forward.1} parent=1 // pred_fallthru
      _
    %v15 = vld [vmem:[%s0] sm:$0xff]
    %v16 = vld [vmem:[%s1] sm:$0xff]
    %v17 = vld [vmem:[%s1 + $0x8] sm:$0xff]
    %v18 = vld [vmem:[%s1 + $0x10] sm:$0xff]
    %v19 = vld [vmem:[%s1 + $0x18] sm:$0xff]
    %v20 = vld [vmem:[%s2] sm:$0x1]
    %v22 = vlaneseq
    %v23 = vshrl.u32 %v22, 7
    %v24 = vsub.s32 0, %v23
    %v25 = vrot.slane %v20, %v24
    %vm27 = vcmask 261120
    %v29 = vsel %vm27, %v15, 0
    %31 = vmatprep.subr.mxu0 0.0
    %32 = vmatpush1.msra.mxu0 %v16
    %33 = vmatprep.subr.mxu0 0.0
    %34 = vmatpush1.msra.mxu0 %v17
    %35 = vmatprep.subr.mxu0 0.0
    %36 = vmatpush1.msra.mxu0 %v18
    %37 = vmatprep.subr.mxu0 0.0
    %38 = vmatpush1.msra.mxu0 %v19
    %39 = vmatprep.subr.mxu0 0.0
    %40 = vmatpush1.msra.mxu0 0.0
    %41 = vmatprep.subr.mxu0 0.0
    %42 = vmatpush1.msra.mxu0 0.0
    %43 = vmatprep.subr.mxu0 0.0
    %44 = vmatpush1.msra.mxu0 0.0
    %45 = vmatprep.subr.mxu0 0.0
    %46 = vmatpush1.msra.mxu0 0.0
    %47 = vmatprep.subr.mxu0 0.0
    %48 = vmatpush1.msra.mxu0 0.0
    %49 = vmatprep.subr.mxu0 0.0
    %50 = vmatpush1.msra.mxu0 0.0
    %51 = vmatprep.subr.mxu0 0.0
    %52 = vmatpush1.msra.mxu0 0.0
    %53 = vmatprep.subr.mxu0 0.0
    %54 = vmatpush1.msra.mxu0 0.0
    %55 = vmatprep.subr.mxu0 0.0
    %56 = vmatpush1.msra.mxu0 0.0
    %57 = vmatprep.subr.mxu0 0.0
    %58 = vmatpush1.msra.mxu0 0.0
    %59 = vmatprep.subr.mxu0 0.0
    %60 = vmatpush1.msra.mxu0 0.0
    %61 = vmatprep.subr.mxu0 0.0
    %62 = vmatpush1.msra.mxu0 0.0
    %63 = vmatprep.subr.mxu0 0.0
    %64 = vmatpush1.msra.mxu0 0.0
    %65 = vmatprep.subr.mxu0 0.0
    %66 = vmatpush1.msra.mxu0 0.0
    %67 = vmatprep.subr.mxu0 0.0
    %68 = vmatpush1.msra.mxu0 0.0
    %69 = vmatprep.subr.mxu0 0.0
    %70 = vmatpush1.msra.mxu0 0.0
    %71 = vmatprep.subr.mxu0 0.0
    %72 = vmatpush1.msra.mxu0 0.0
    %73 = vmatprep.subr.mxu0 0.0
    %74 = vmatpush1.msra.mxu0 0.0
    %75 = vmatprep.subr.mxu0 0.0
    %76 = vmatpush1.msra.mxu0 0.0
    %77 = vmatprep.subr.mxu0 0.0
    %78 = vmatpush1.msra.mxu0 0.0
    %79 = vmatprep.subr.mxu0 0.0
    %80 = vmatpush1.msra.mxu0 0.0
    %81 = vmatprep.subr.mxu0 0.0
    %82 = vmatpush1.msra.mxu0 0.0
    %83 = vmatprep.subr.mxu0 0.0
    %84 = vmatpush1.msra.mxu0 0.0
    %85 = vmatprep.subr.mxu0 0.0
    %86 = vmatpush1.msra.mxu0 0.0
    %87 = vmatprep.subr.mxu0 0.0
    %88 = vmatpush1.msra.mxu0 0.0
    %89 = vmatprep.subr.mxu0 0.0
    %90 = vmatpush1.msra.mxu0 0.0
    %91 = vmatprep.subr.mxu0 0.0
    %92 = vmatpush1.msra.mxu0 0.0
    %93 = vmatprep.subr.mxu0 0.0
    %94 = vmatpush1.msra.mxu0 0.0
    %95 = vmatprep.mubr.f32.mxu0 0.0
    %96 = vmatmul.mubr.f32.gmra.mrb[0].mxu0 %v29
    %v97 = vpop.f32.mrb[0].mxu0
    %v98 = vadd.f32 %v25, %v97
    %v99 = vpop.f32.mrb[0].mxu0
    %100 = vdwg.mxu0
    %vm101 = vcmask 64512
    %102 = vst.msk [vmem:[#allocation2] sm:$0xff] %vm101, %v98
    // Predicated region
    $region14: #{nn_linear_forward.1} parent=1 // pred_check
      _
    $region15: #{nn_linear_forward.1} parent=1 // pred_check_branch
      %104 = sbr.rel (0) target = $region17
    $region16: #{nn_linear_forward.1} parent=1 // pred_region
      %s106 = ssub.s32 128, 128
      %107 = vsyncadd [#allocation3], %s106
      %s109 = sshll.u32 [#allocation2], 4
      %s110 = int_to_ptr.vmem [resolvable:$true] %s109
      %112 = dma.vmem_to_hbm [thread:$0]  %s110, 128, %s3, [#allocation3]
    $region17: #{nn_linear_forward.1} parent=1 // pred_fallthru
      _
    // Predicated region
    $region18: #{nn_linear_forward.1} parent=1 // pred_check
      _
    $region19: #{nn_linear_forward.1} parent=1 // pred_check_branch
      %114 = sbr.rel (0) target = $region21
    $region20: #{nn_linear_forward.1} parent=1 // pred_region
      %115 = dma.done [#allocation3], 128
    $region21: #{nn_linear_forward.1} parent=1 // pred_fallthru
      _
    %116 = vsyncpa [#allocation3], 1

</llo_original>
